<compile_context>
chip_gen: v7x
topology: tpu7x:2x2x1
jax: 0.10.0
libtpu: 0.0.40
codegen_flags: <defaults>
</compile_context>

<pallas_src>
import jax
import jax.numpy as jnp
from jax.experimental import pallas as pl
from jax.experimental.pallas import tpu as pltpu


def _decoder_kernel(s_ref, t_ref, w_ref, b_ref, out_ref):
    # s_ref / t_ref: (L, B*D)   w_ref: (P, L)   b_ref: (P, 1)   out_ref: (P, B*D)
    st = s_ref[...] + t_ref[...]                                       # VPU add
    acc = jnp.dot(w_ref[...], st, preferred_element_type=jnp.float32)  # single MXU op
    out_ref[...] = (acc + b_ref[...]).astype(out_ref.dtype)


def _pallas_decode(s2, t2, w_comb, b_comb2):
    P = w_comb.shape[0]
    BD = s2.shape[1]
    return pl.pallas_call(
        _decoder_kernel,
        out_shape=jax.ShapeDtypeStruct((P, BD), jnp.float32),
        in_specs=[
            pl.BlockSpec(memory_space=pltpu.MemorySpace.VMEM),  # s  (L, B*D)
            pl.BlockSpec(memory_space=pltpu.MemorySpace.VMEM),  # t  (L, B*D)
            pl.BlockSpec(memory_space=pltpu.MemorySpace.VMEM),  # W_comb (P, L)
            pl.BlockSpec(memory_space=pltpu.MemorySpace.VMEM),  # b_comb (P, 1)
        ],
        out_specs=pl.BlockSpec(memory_space=pltpu.MemorySpace.VMEM),
    )(s2, t2, w_comb, b_comb2)


@jax.jit
def small_decoder_freq(enc_s, enc_t, w_s, b_s, w_ts, b_ts):
    """enc_s, enc_t: (B, L, D) float32 ; returns (B, P, D) float32."""
    B, L, D = enc_s.shape
    P = w_ts.shape[0]
    BD = B * D

    # Precompute combined weight/bias once (plain XLA, fused under jit):
    #   x = (W_ts @ W_s) @ (s + t) + (2 * W_ts @ b_s + b_ts)
    w_comb = jnp.dot(w_ts, w_s)                               # (P, L)
    b_comb2 = (2.0 * jnp.dot(w_ts, b_s) + b_ts).reshape(P, 1)  # (P, 1)

    # Layout plumbing: (B, L, D) -> (L, B*D) so L sits on sublanes, B*D on lanes.
    s2 = jnp.transpose(enc_s, (1, 0, 2)).reshape(L, BD)
    t2 = jnp.transpose(enc_t, (1, 0, 2)).reshape(L, BD)

    out2 = _pallas_decode(s2, t2, w_comb, b_comb2)            # (P, B*D)

    # (P, B*D) -> (B, P, D)
    return jnp.transpose(out2.reshape(P, B, D), (1, 0, 2))


def _ref_impl(enc_s, enc_t, w_s, b_s, w_ts, b_ts):
    # Pure-JAX reference mirroring the PyTorch forward.
    conv = lambda x, w, b: jnp.einsum("oc,bcd->bod", w, x) + b[None, :, None]
    x_s = conv(enc_s, w_s, b_s)
    x_t = conv(enc_t, w_s, b_s)          # conv_out_s applied to enc_t too (PyTorch quirk)
    return conv(x_s + x_t, w_ts, b_ts)


if __name__ == "__main__":
    # Small config: seq_len=8, pred_len=8, feature dim D=32, batch=2.
    B, seq_len, pred_len, D = 2, 8, 8, 32

    key = jax.random.PRNGKey(0)
    k1, k2, k3, k4, k5, k6 = jax.random.split(key, 6)

    # Deterministic parameter init (matching PyTorch Conv1d uniform(-1/sqrt(Cin), 1/sqrt(Cin)))
    bound_s = 1.0 / jnp.sqrt(seq_len)
    w_s = jax.random.uniform(k1, (seq_len, seq_len), jnp.float32, -bound_s, bound_s)
    b_s = jax.random.uniform(k2, (seq_len,), jnp.float32, -bound_s, bound_s)
    # conv_out_t exists in __init__ but is unused in forward; skip it.
    w_ts = jax.random.uniform(k3, (pred_len, seq_len), jnp.float32, -bound_s, bound_s)
    b_ts = jax.random.uniform(k4, (pred_len,), jnp.float32, -bound_s, bound_s)

    enc_s = jax.random.normal(k5, (B, seq_len, D), jnp.float32)
    enc_t = jax.random.normal(k6, (B, seq_len, D), jnp.float32)

    out = small_decoder_freq(enc_s, enc_t, w_s, b_s, w_ts, b_ts)
    out = jax.block_until_ready(out)

    ref = _ref_impl(enc_s, enc_t, w_s, b_s, w_ts, b_ts)
    assert out.shape == (B, pred_len, D)
    assert jnp.allclose(out, ref, atol=1e-5, rtol=1e-5), "mismatch vs reference"
    print("KERNEL_OK")
</pallas_src>

<mosaic_0001>
module attributes {stable_mosaic.version = 11 : i64} {
  func.func @_decoder_kernel(%arg0: memref<8x64xf32, #tpu.memory_space<vmem>>, %arg1: memref<8x64xf32, #tpu.memory_space<vmem>>, %arg2: memref<8x8xf32, #tpu.memory_space<vmem>>, %arg3: memref<8x1xf32, #tpu.memory_space<vmem>>, %arg4: memref<8x64xf32, #tpu.memory_space<vmem>>) attributes {dimension_semantics = [], scalar_prefetch = 0 : i64, scratch_operands = 0 : i64, tpu.core_type = #tpu.core_type<tc>} {
    %c0 = arith.constant 0 : index
    %c0_0 = arith.constant 0 : index
    %0 = vector.load %arg0[%c0, %c0_0] : memref<8x64xf32, #tpu.memory_space<vmem>>, vector<8x64xf32>
    %c0_1 = arith.constant 0 : index
    %c0_2 = arith.constant 0 : index
    %1 = vector.load %arg1[%c0_1, %c0_2] : memref<8x64xf32, #tpu.memory_space<vmem>>, vector<8x64xf32>
    %2 = arith.addf %0, %1 : vector<8x64xf32>
    %c0_3 = arith.constant 0 : index
    %c0_4 = arith.constant 0 : index
    %3 = vector.load %arg2[%c0_3, %c0_4] : memref<8x8xf32, #tpu.memory_space<vmem>>, vector<8x8xf32>
    %cst = arith.constant dense<0.000000e+00> : vector<8x64xf32>
    %4 = tpu.matmul %3, %2, %cst {dimension_numbers = #tpu.dot_dimension_numbers<[1], [0], [0], [1], [0, 0, 1, 1], [], []>} : vector<8x8xf32>, vector<8x64xf32>, vector<8x64xf32> -> vector<8x64xf32>
    %c0_5 = arith.constant 0 : index
    %c0_6 = arith.constant 0 : index
    %5 = vector.load %arg3[%c0_5, %c0_6] : memref<8x1xf32, #tpu.memory_space<vmem>>, vector<8x1xf32>
    %6 = vector.broadcast %5 : vector<8x1xf32> to vector<8x64xf32>
    %7 = arith.addf %4, %6 : vector<8x64xf32>
    %c0_7 = arith.constant 0 : index
    %c0_8 = arith.constant 0 : index
    %8 = vector.load %arg4[%c0_7, %c0_8] : memref<8x64xf32, #tpu.memory_space<vmem>>, vector<8x64xf32>
    tpu.vector_store %arg4[%c0_7, %c0_8], %7 {strides = array<i32>} : memref<8x64xf32, #tpu.memory_space<vmem>>, vector<8x64xf32>,
    return
  }
}

</mosaic_0001>

<llo_original>
// kernel: small_decoder_freq.1
$region0: #{small_decoder_freq.1}
  #allocation0 [shape = 'u32[]', space=smem, size = 0x4, offset = 0x4, fixed_abs, tag = 'smem constant byte address 0x4 - core index']
  #allocation1 [shape = 'u32[144,128]{1,0:T(1,128)}', space=vmem, size = 0x12000, scoped, tag = 'internal scratch']
  %s0 = inlined_call_operand.vmem [shape: f32[8,64], index: 0, kind: input, shape index: {}]
  %s1 = inlined_call_operand.vmem [shape: f32[8,64], index: 1, kind: input, shape index: {}]
  %s2 = inlined_call_operand.vmem [shape: f32[8,8], index: 2, kind: input, shape index: {}]
  %s3 = inlined_call_operand.vmem [shape: f32[8,1], index: 3, kind: input, shape index: {}]
  %s4 = inlined_call_operand.vmem [shape: f32[8,64], index: 4, kind: output, shape index: {}]
  %s5 = sld [smem:[#allocation0]]
  $region26: #{small_decoder_freq.1} parent=0
    _
  %s7 = ssub.s32 1, %s5
  %s8 = scalar_select 0, %s7, %s5
  // Predicated region
  $region2: #{small_decoder_freq.1} parent=0 // pred_check
    _
  $region3: #{small_decoder_freq.1} parent=0 // pred_check_branch
    %10 = sbr.rel (0) target = $region5
  $region4: #{small_decoder_freq.1} parent=0 // pred_region
    _
  $region5: #{small_decoder_freq.1} parent=0 // pred_fallthru
    _
  // Predicated region
  $region6: #{small_decoder_freq.1} parent=0 // pred_check
    _
  $region7: #{small_decoder_freq.1} parent=0 // pred_check_branch
    %12 = sbr.rel (0) target = $region9
  $region8: #{small_decoder_freq.1} parent=0 // pred_region
    _
  $region9: #{small_decoder_freq.1} parent=0 // pred_fallthru
    _
  // Predicated region
  $region10: #{small_decoder_freq.1} parent=0 // pred_check
    _
  $region11: #{small_decoder_freq.1} parent=0 // pred_check_branch
    %14 = sbr.rel (0) target = $region13
  $region12: #{small_decoder_freq.1} parent=0 // pred_region
    _
  $region13: #{small_decoder_freq.1} parent=0 // pred_fallthru
    _
  // Predicated region
  $region14: #{small_decoder_freq.1} parent=0 // pred_check
    _
  $region15: #{small_decoder_freq.1} parent=0 // pred_check_branch
    %16 = sbr.rel (0) target = $region17
  $region16: #{small_decoder_freq.1} parent=0 // pred_region
    _
  $region17: #{small_decoder_freq.1} parent=0 // pred_fallthru
    _
  %v17 = vld [vmem:[%s0] sm:$0xff]
  %v18 = vld [vmem:[%s1] sm:$0xff]
  %v19 = vadd.f32 %v17, %v18
  %v20 = vld [vmem:[%s2] sm:$0xff]
  %v21 = vld [vmem:[%s3] sm:$0xff]
  %23 = vset.pattern.permute.xlu0 0
  %24 = vperm.xlu0 %23, %v21
  %v25 = vpop.permute.xlu0 %24
  %vm27 = vcmask 64512
  %v29 = vsel %vm27, %v20, 0
  %31 = vmatprep.subr.mxu0 0.0
  %32 = vmatpush1.msra.mxu0 %v19
  %33 = vmatprep.subr.mxu0 0.0
  %34 = vmatpush1.msra.mxu0 0.0
  %35 = vmatprep.subr.mxu0 0.0
  %36 = vmatpush1.msra.mxu0 0.0
  %37 = vmatprep.subr.mxu0 0.0
  %38 = vmatpush1.msra.mxu0 0.0
  %39 = vmatprep.subr.mxu0 0.0
  %40 = vmatpush1.msra.mxu0 0.0
  %41 = vmatprep.subr.mxu0 0.0
  %42 = vmatpush1.msra.mxu0 0.0
  %43 = vmatprep.subr.mxu0 0.0
  %44 = vmatpush1.msra.mxu0 0.0
  %45 = vmatprep.subr.mxu0 0.0
  %46 = vmatpush1.msra.mxu0 0.0
  %47 = vmatprep.subr.mxu0 0.0
  %48 = vmatpush1.msra.mxu0 0.0
  %49 = vmatprep.subr.mxu0 0.0
  %50 = vmatpush1.msra.mxu0 0.0
  %51 = vmatprep.subr.mxu0 0.0
  %52 = vmatpush1.msra.mxu0 0.0
  %53 = vmatprep.subr.mxu0 0.0
  %54 = vmatpush1.msra.mxu0 0.0
  %55 = vmatprep.subr.mxu0 0.0
  %56 = vmatpush1.msra.mxu0 0.0
  %57 = vmatprep.subr.mxu0 0.0
  %58 = vmatpush1.msra.mxu0 0.0
  %59 = vmatprep.subr.mxu0 0.0
  %60 = vmatpush1.msra.mxu0 0.0
  %61 = vmatprep.subr.mxu0 0.0
  %62 = vmatpush1.msra.mxu0 0.0
  %63 = vmatprep.subr.mxu0 0.0
  %64 = vmatpush1.msra.mxu0 0.0
  %65 = vmatprep.subr.mxu0 0.0
  %66 = vmatpush1.msra.mxu0 0.0
  %67 = vmatprep.subr.mxu0 0.0
  %68 = vmatpush1.msra.mxu0 0.0
  %69 = vmatprep.subr.mxu0 0.0
  %70 = vmatpush1.msra.mxu0 0.0
  %71 = vmatprep.subr.mxu0 0.0
  %72 = vmatpush1.msra.mxu0 0.0
  %73 = vmatprep.subr.mxu0 0.0
  %74 = vmatpush1.msra.mxu0 0.0
  %75 = vmatprep.subr.mxu0 0.0
  %76 = vmatpush1.msra.mxu0 0.0
  %77 = vmatprep.subr.mxu0 0.0
  %78 = vmatpush1.msra.mxu0 0.0
  %79 = vmatprep.subr.mxu0 0.0
  %80 = vmatpush1.msra.mxu0 0.0
  %81 = vmatprep.subr.mxu0 0.0
  %82 = vmatpush1.msra.mxu0 0.0
  %83 = vmatprep.subr.mxu0 0.0
  %84 = vmatpush1.msra.mxu0 0.0
  %85 = vmatprep.subr.mxu0 0.0
  %86 = vmatpush1.msra.mxu0 0.0
  %87 = vmatprep.subr.mxu0 0.0
  %88 = vmatpush1.msra.mxu0 0.0
  %89 = vmatprep.subr.mxu0 0.0
  %90 = vmatpush1.msra.mxu0 0.0
  %91 = vmatprep.subr.mxu0 0.0
  %92 = vmatpush1.msra.mxu0 0.0
  %93 = vmatprep.subr.mxu0 0.0
  %94 = vmatpush1.msra.mxu0 0.0
  %95 = vmatprep.mubr.f32.mxu0 0.0
  %96 = vmatmul.mubr.f32.gmra.mrb[0].mxu0 %v29
  %v97 = vpop.f32.mrb[0].mxu0
  %v98 = vadd.f32 %v25, %v97
  %v99 = vpop.f32.mrb[0].mxu0
  %100 = vdwg.mxu0
  %vm101 = vcmask 523264
  %102 = vst.msk [vmem:[%s4] sm:$0xff] %vm101, %v98
  // Predicated region
  $region18: #{small_decoder_freq.1} parent=0 // pred_check
    _
  $region19: #{small_decoder_freq.1} parent=0 // pred_check_branch
    %104 = sbr.rel (0) target = $region21
  $region20: #{small_decoder_freq.1} parent=0 // pred_region
    _
  $region21: #{small_decoder_freq.1} parent=0 // pred_fallthru
    _
  // Predicated region
  $region22: #{small_decoder_freq.1} parent=0 // pred_check
    _
  $region23: #{small_decoder_freq.1} parent=0 // pred_check_branch
    %106 = sbr.rel (0) target = $region25
  $region24: #{small_decoder_freq.1} parent=0 // pred_region
    _
  $region25: #{small_decoder_freq.1} parent=0 // pred_fallthru
    _

</llo_original>
